<compile_context>
chip_gen: v6e
topology: v6e:2x2x1
jax: 0.10.0
libtpu: 0.0.40
codegen_flags: <defaults>
</compile_context>

<pallas_src>
import jax
import jax.numpy as jnp
from jax.experimental import pallas as pl
from jax.experimental.pallas import tpu as pltpu


def _swish_kernel(x_ref, o_ref):
    # Upcast to f32 for the math: converts + f32 EUP exp are free filler under
    # the memory bound; loads/stores stay in the input dtype.
    x = x_ref[...].astype(jnp.float32)
    o_ref[...] = (x * jax.nn.sigmoid(x)).astype(o_ref.dtype)


_LANE_WIDTH = 1024            # 8 x 128 lanes -> lane-dense, unmasked vst
_VMEM_LIMIT_BYTES = 48 << 20  # explicit scoped-VMEM limit; headroom on all gens


def _target_block_bytes():
    """Per-generation block-size target (HBM roofline vs. per-step overhead)."""
    try:
        kind = jax.devices()[0].device_kind.lower()
    except Exception:
        return 4 * 1024 * 1024
    if "v5 lite" in kind or "v5e" in kind or "v5lite" in kind:
        return 2 * 1024 * 1024   # ~0.82 TB/s: 2 MiB already <7% step overhead
    if "v7" in kind:
        return 6 * 1024 * 1024   # ~3.2 TB/s: bigger blocks hide the step cost
    return 4 * 1024 * 1024       # v6e and default


def swish(x):
    """Elementwise Swish via Pallas. Accepts any shape; returns same shape/dtype."""
    orig_shape = x.shape
    orig_dtype = x.dtype
    n = x.size
    if n == 0:
        return x

    W = _LANE_WIDTH
    itemsize = jnp.dtype(orig_dtype).itemsize
    # Native sublane packing: 8 rows/vreg for 4-byte, 16 for 2-byte, 32 for 1-byte.
    sub = max(8, 32 // itemsize)

    x_flat = x.reshape(-1)  # contiguous activation tensor -> effectively free
    compiler_params = pltpu.CompilerParams(
        dimension_semantics=("parallel",),
        vmem_limit_bytes=_VMEM_LIMIT_BYTES,
    )

    if n % W == 0:
        # ---- Hot path: lane-dense (rows, 1024) slab, no padding needed. ----
        rows = n // W
        tile_rows = max(sub, (_target_block_bytes() // (W * itemsize)) // sub * sub)
        if rows <= tile_rows:
            if rows >= 2 * sub:
                # Split into >=2 blocks so both TensorCores run under megacore
                # sharding (v7x has 2 TCs/chip); ragged last block is masked.
                tile_rows = pl.cdiv(pl.cdiv(rows, 2), sub) * sub
            else:
                tile_rows = rows  # single block == full array dims (always legal)
        grid = (pl.cdiv(rows, tile_rows),)
        x2d = x_flat.reshape(rows, W)

        out2d = pl.pallas_call(
            _swish_kernel,
            out_shape=jax.ShapeDtypeStruct((rows, W), orig_dtype),
            grid=grid,
            in_specs=[pl.BlockSpec((tile_rows, W), lambda i: (i, 0))],
            out_specs=pl.BlockSpec((tile_rows, W), lambda i: (i, 0)),
            compiler_params=compiler_params,
        )(x2d)
        return out2d.reshape(orig_shape)

    # ---- Unaligned path: (1, n) layout, ragged last block masked. -----------
    # No full-array concatenate pad and no output slice copy: the kernel's own
    # HBM read + write is the only traffic. swish is elementwise, so the masked
    # (never-written-back) tail of the last block is harmless.
    x2d = x_flat.reshape(1, n)
    max_cols = 128 * 1024  # modest (1, cols) blocks: layout-safe on all gens
    tile_cols = n if n <= max_cols else max_cols  # multiple of 128 or full dim
    grid = (pl.cdiv(n, tile_cols),)

    out2d = pl.pallas_call(
        _swish_kernel,
        out_shape=jax.ShapeDtypeStruct((1, n), orig_dtype),
        grid=grid,
        in_specs=[pl.BlockSpec((1, tile_cols), lambda i: (0, i))],
        out_specs=pl.BlockSpec((1, tile_cols), lambda i: (0, i)),
        compiler_params=compiler_params,
    )(x2d)
    return out2d.reshape(orig_shape)


if __name__ == "__main__":
    key = jax.random.PRNGKey(0)

    # 1) NCHW conv-style activation (aligned hot path, single full block).
    x = jax.random.normal(key, (2, 4, 16, 16), dtype=jnp.float32)
    y = swish(x)
    jax.block_until_ready(y)
    y_ref = x * jax.nn.sigmoid(x)
    assert y.shape == x.shape and y.dtype == x.dtype
    assert jnp.allclose(y, y_ref, atol=1e-6, rtol=1e-6)

    # 2) Larger aligned shape: exercises the >=2-block megacore split (grid > 1).
    x1 = jax.random.normal(jax.random.PRNGKey(2), (4, 16, 32, 32), dtype=jnp.float32)
    y1 = swish(x1)
    jax.block_until_ready(y1)
    y1_ref = x1 * jax.nn.sigmoid(x1)
    assert y1.shape == x1.shape and y1.dtype == x1.dtype
    assert jnp.allclose(y1, y1_ref, atol=1e-6, rtol=1e-6)

    # 3) Unaligned shape: exercises the pad-free / slice-free ragged path.
    x2 = jax.random.normal(jax.random.PRNGKey(1), (3, 5, 7), dtype=jnp.float32)
    y2 = swish(x2)
    jax.block_until_ready(y2)
    y2_ref = x2 * jax.nn.sigmoid(x2)
    assert y2.shape == x2.shape and y2.dtype == x2.dtype
    assert jnp.allclose(y2, y2_ref, atol=1e-6, rtol=1e-6)

    # 4) bf16 input: exercises the in-kernel f32 upcast and dtype-aware tiling.
    x3 = jax.random.normal(jax.random.PRNGKey(3), (4, 8, 16, 16), dtype=jnp.bfloat16)
    y3 = swish(x3)
    jax.block_until_ready(y3)
    x3f = x3.astype(jnp.float32)
    y3_ref = x3f * jax.nn.sigmoid(x3f)
    assert y3.shape == x3.shape and y3.dtype == x3.dtype
    assert jnp.allclose(y3.astype(jnp.float32), y3_ref, atol=5e-2, rtol=5e-2)

    print("KERNEL_OK")
</pallas_src>

<mosaic_0001>
module attributes {stable_mosaic.version = 11 : i64} {
  func.func @_swish_kernel(%arg0: i32, %arg1: memref<2x1024xf32, #tpu.memory_space<vmem>>, %arg2: memref<2x1024xf32, #tpu.memory_space<vmem>>) attributes {dimension_semantics = [#tpu.dimension_semantics<parallel>], iteration_bounds = array<i64: 1>, scalar_prefetch = 0 : i64, scratch_operands = 0 : i64, tpu.core_type = #tpu.core_type<tc>, window_params = [{transform_indices = @transform_0, window_bounds = array<i64: 2, 1024>}, {transform_indices = @transform_1, window_bounds = array<i64: 2, 1024>}]} {
    %c0 = arith.constant 0 : index
    %c0_0 = arith.constant 0 : index
    %0 = vector.load %arg1[%c0, %c0_0] : memref<2x1024xf32, #tpu.memory_space<vmem>>, vector<2x1024xf32>
    %1 = arith.negf %0 : vector<2x1024xf32>
    %2 = math.exp %1 : vector<2x1024xf32>
    %cst = arith.constant 1.000000e+00 : f32
    %3 = vector.broadcast %cst : f32 to vector<2x1024xf32>
    %4 = arith.addf %3, %2 : vector<2x1024xf32>
    %5 = arith.divf %3, %4 : vector<2x1024xf32>
    %6 = arith.mulf %0, %5 : vector<2x1024xf32>
    %c0_1 = arith.constant 0 : index
    %c0_2 = arith.constant 0 : index
    %7 = vector.load %arg2[%c0_1, %c0_2] : memref<2x1024xf32, #tpu.memory_space<vmem>>, vector<2x1024xf32>
    tpu.vector_store %arg2[%c0_1, %c0_2], %6 {strides = array<i32>} : memref<2x1024xf32, #tpu.memory_space<vmem>>, vector<2x1024xf32>,
    return
  }
  func.func @transform_0(%arg0: i32) -> (i32, i32) {
    %c0_i32 = arith.constant 0 : i32
    %c0_i32_0 = arith.constant 0 : i32
    return %arg0, %c0_i32 : i32, i32
  }
  func.func @transform_1(%arg0: i32) -> (i32, i32) {
    %c0_i32 = arith.constant 0 : i32
    %c0_i32_0 = arith.constant 0 : i32
    return %arg0, %c0_i32 : i32, i32
  }
}

</mosaic_0001>

<llo_original>
// kernel: tpu_custom_call.1
$region0: #{tpu_custom_call.1}
  #allocation0 [shape = 'u32[]', space=smem, size = 0x4, offset = 0x4, fixed_abs, tag = 'smem constant byte address 0x4 - core index']
  #allocation1 [shape = 'u32[144,128]{1,0:T(1,128)}', space=vmem, size = 0x12000, scoped, tag = 'internal scratch']
  %s0 = inlined_call_operand.hbm [shape: f32[2,1024], index: 0, kind: input, shape index: {}]
  %s1 = inlined_call_operand.hbm [shape: f32[2,1024], index: 1, kind: output, shape index: {}]
  %s2 = sld [smem:[#allocation0]]
  $region18: #{tpu_custom_call.1} parent=0
    _
  %s4 = ssub.s32 1, %s2
  %s5 = scalar_select 0, %s4, %s2
  $region1: #{tpu_custom_call.1} parent=0
    #allocation2 [shape = 'u8[8192]{0}', space=vmem, size = 0x2000, scoped, tag = 'input window, operand 0, single buffered']
    #allocation3 [shape = 's32[1]{0}', space=sflag, size = 0x4, scoped, tag = 'scoped memory for tpu_custom_call.1']
    #allocation4 [shape = 's32[1]{0}', space=sflag, size = 0x4, scoped, tag = 'scoped memory for tpu_custom_call.1']
    #allocation5 [shape = 'u8[8192]{0}', space=vmem, size = 0x2000, scoped, tag = 'output window, operand 0, single buffered']
    %6 = vsyncpa [#allocation3], 0
    %7 = vsyncpa [#allocation4], 0
    // Predicated region
    $region2: #{tpu_custom_call.1} parent=1 // pred_check
      _
    $region3: #{tpu_custom_call.1} parent=1 // pred_check_branch
      %9 = sbr.rel (0) target = $region5
    $region4: #{tpu_custom_call.1} parent=1 // pred_region
      %s11 = ssub.s32 256, 256
      %12 = vsyncadd [#allocation3], %s11
      %s14 = sshll.u32 [#allocation2], 4
      %s15 = int_to_ptr.vmem [resolvable:$true] %s14
      %17 = dma.hbm_to_vmem [thread:$0]  %s0, 256, %s15, [#allocation3]
    $region5: #{tpu_custom_call.1} parent=1 // pred_fallthru
      _
    // Predicated region
    $region6: #{tpu_custom_call.1} parent=1 // pred_check
      _
    $region7: #{tpu_custom_call.1} parent=1 // pred_check_branch
      %19 = sbr.rel (0) target = $region9
    $region8: #{tpu_custom_call.1} parent=1 // pred_region
      %20 = dma.done [#allocation3], 256
    $region9: #{tpu_custom_call.1} parent=1 // pred_fallthru
      _
    %v21 = vld [vmem:[#allocation2] sm:$0xff]
    %v22 = vld [vmem:[#allocation2 + $0x8] sm:$0xff]
    %v23 = vxor.u32 %v21, 2147483648
    %v24 = vxor.u32 %v22, 2147483648
    %v25 = vmul.f32 %v23, 1.442695
    %v26 = vpow.pop %v25
    %v27 = vmul.f32 %v24, 1.442695
    %v28 = vpow.pop %v27
    %v29 = vadd.f32 %v26, 1.0
    %v30 = vadd.f32 %v28, 1.0
    %v31 = vrcp.pop %v29
    %v32 = vmul.f32 1.0, %v31
    %v33 = vrcp.pop %v30
    %v34 = vmul.f32 1.0, %v33
    %v35 = vmul.f32 %v21, %v32
    %v36 = vmul.f32 %v22, %v34
    %37 = vst [vmem:[#allocation5] sm:$0xff] %v35
    %38 = vst [vmem:[#allocation5 + $0x8] sm:$0xff] %v36
    // Predicated region
    $region10: #{tpu_custom_call.1} parent=1 // pred_check
      _
    $region11: #{tpu_custom_call.1} parent=1 // pred_check_branch
      %40 = sbr.rel (0) target = $region13
    $region12: #{tpu_custom_call.1} parent=1 // pred_region
      %s42 = ssub.s32 256, 256
      %43 = vsyncadd [#allocation4], %s42
      %s45 = sshll.u32 [#allocation5], 4
      %s46 = int_to_ptr.vmem [resolvable:$true] %s45
      %48 = dma.vmem_to_hbm [thread:$0]  %s46, 256, %s1, [#allocation4]
    $region13: #{tpu_custom_call.1} parent=1 // pred_fallthru
      _
    // Predicated region
    $region14: #{tpu_custom_call.1} parent=1 // pred_check
      _
    $region15: #{tpu_custom_call.1} parent=1 // pred_check_branch
      %50 = sbr.rel (0) target = $region17
    $region16: #{tpu_custom_call.1} parent=1 // pred_region
      %51 = dma.done [#allocation4], 256
    $region17: #{tpu_custom_call.1} parent=1 // pred_fallthru
      _
    %52 = vsyncpa [#allocation3], 1
    %53 = vsyncpa [#allocation4], 1

</llo_original>
